<compile_context>
chip_gen: v6e
topology: v6e:2x2x1
jax: 0.10.0
libtpu: 0.0.40
codegen_flags: <defaults>
</compile_context>

<pallas_src>
import functools

import numpy as np
import jax
import jax.numpy as jnp
from jax.experimental import pallas as pl
from jax.experimental.pallas import tpu as pltpu

HIDDEN = 10          # hidden width from dims = (1, 10)
LANE = 128
SUBLANE = 8
_VMEM_LIMIT = 32 * 1024 * 1024
_TILE_N_DEFAULT = 1024


def _round_up(x, m):
    return ((x + m - 1) // m) * m


def _write_modal_base(res_ref, vals, e, F, q, col0):
    """Write one modality's [X | W | E] block into lane slices of res_ref starting at col0.
    W[:, j*F + i] = E[:, j] * vals[:, i]  (matches the PyTorch reshape order)."""
    res_ref[:, col0:col0 + F] = vals
    for j in range(q):
        off = col0 + (j + 1) * F
        res_ref[:, off:off + F] = vals * e[:, j:j + 1]
    off = col0 + (q + 1) * F
    res_ref[:, off:off + q] = e


def _pass1_kernel(in_ref, w1_ref, b1_ref, w2_ref, b2_ref, res_ref, stats_ref,
                  *, n, tile_n, r, p, q, d_tot, d_pad, mlp_dtype):
    """Build NAM features, apply the per-feature MLP + skip, emit pre-BN res + column stats."""
    zin = in_ref[...]                                    # [tile_n, in_w]  (Z | X | E | 0)
    z = zin[:, 0:r]
    x = zin[:, r:r + p]
    e = zin[:, r + p:r + p + q]

    d_g = r * (q + 1) + q
    # Assemble the feature slab directly in the output block (acts as VMEM scratch).
    _write_modal_base(res_ref, z, e, r, q, 0)            # G modality
    _write_modal_base(res_ref, x, e, p, q, d_g)          # I modality
    if d_pad > d_tot:
        res_ref[:, d_tot:] = jnp.zeros((tile_n, d_pad - d_tot), jnp.float32)

    base = res_ref[...]                                  # [tile_n, d_pad], f32
    cbase = base.astype(mlp_dtype)

    # Per-feature 1 -> HIDDEN -> 1 ReLU MLP (NAM), statically unrolled on the VPU.
    # Products in mlp_dtype (bf16 doubles VALU throughput on v6e/v7x); accumulation in f32.
    def term(h):
        hid = jnp.maximum(w1_ref[h:h + 1, :] * cbase + b1_ref[h:h + 1, :], 0.0)
        return (w2_ref[h:h + 1, :] * hid).astype(jnp.float32)

    acc = b2_ref[...] + term(0)
    for h in range(1, HIDDEN):
        acc = acc + term(h)

    res = base + acc                                     # skip connection
    res_ref[...] = res

    # Per-column sum / sum-of-squares; mask rows that are batch padding.
    row = pl.program_id(0) * tile_n + jax.lax.broadcasted_iota(jnp.int32, (tile_n, 1), 0)
    mask = (row < n).astype(jnp.float32)
    rm = res * mask
    stats_ref[0:1, :] = jnp.sum(rm, axis=0, keepdims=True)
    stats_ref[1:2, :] = jnp.sum(rm * res, axis=0, keepdims=True)


def _pass2_kernel(res_ref, mean_ref, scale_ref, out_ref, *, tile_n, r, p, q, out_w):
    """Normalize with the global batch statistics and emit the packed per-modality outputs."""
    d_g = r * (q + 1) + q
    res = (res_ref[...] - mean_ref[...]) * scale_ref[...]   # scale = coef * rsqrt(var + eps)

    def modal(col0, F):
        sep = res[:, col0:col0 + F]
        for j in range(1, q + 1):
            sep = sep + res[:, col0 + j * F:col0 + (j + 1) * F]
        e_off = col0 + (q + 1) * F
        pred = (jnp.sum(sep, axis=1, keepdims=True)
                + jnp.sum(res[:, e_off:e_off + q], axis=1, keepdims=True))
        return sep, pred

    sep_g, pred_g = modal(0, r)
    sep_i, pred_i = modal(d_g, p)

    # packed output block: [ sep_G (r) | sep_I (p) | pred_G (1) | pred_I (1) | 0-pad ]
    out_ref[:, 0:r] = sep_g
    out_ref[:, r:r + p] = sep_i
    out_ref[:, r + p:r + p + 1] = pred_g
    out_ref[:, r + p + 1:r + p + 2] = pred_i
    if out_w > r + p + 2:
        out_ref[:, r + p + 2:] = jnp.zeros((tile_n, out_w - (r + p + 2)), jnp.float32)


def make_single_modal_params(key, F, q, hidden=HIDDEN):
    """NAM subnet params for one modality, flattened to the [X | W | E] column order.
    Init matches NAM_linear._init_xavier (weights uniform, biases zero); coef = 1 / D."""
    val1 = float(np.sqrt(6.0 / (1 + hidden)))   # NAM_linear(in=1,  out=hidden)
    val2 = float(np.sqrt(6.0 / (hidden + 1)))   # NAM_linear(in=hidden, out=1)
    D = F * (q + 1) + q
    k1, k2 = jax.random.split(key)
    return dict(
        w1=jax.random.uniform(k1, (hidden, D), jnp.float32, -val1, val1),
        b1=jnp.zeros((hidden, D), jnp.float32),
        w2=jax.random.uniform(k2, (hidden, D), jnp.float32, -val2, val2),
        b2=jnp.zeros((1, D), jnp.float32),
        coef=jnp.full((1, D), 1.0 / D, jnp.float32),
    )


def _pack_params(params_G, params_I, d_pad, mlp_dtype):
    """Pack both modalities' flat params back-to-back along lanes, pad to d_pad lanes."""
    def cat(name, dtype):
        a = jnp.concatenate([params_G[name], params_I[name]], axis=1)
        a = jnp.pad(a, ((0, 0), (0, d_pad - a.shape[1])))
        return a.astype(dtype)
    return (cat('w1', mlp_dtype), cat('b1', mlp_dtype), cat('w2', mlp_dtype),
            cat('b2', jnp.float32), cat('coef', jnp.float32))


def model_multi_modal(Z, X, E, params_G, params_I, *, tile_n=None, mlp_dtype=jnp.float32):
    """Model_multi_modal.forward: both single-modal NAMs fused into a two-pass Pallas pipeline."""
    n, r = Z.shape
    _, p = X.shape
    _, q = E.shape
    d_g = r * (q + 1) + q
    d_i = p * (q + 1) + q
    d_tot = d_g + d_i
    d_pad = _round_up(d_tot, LANE)
    in_w = _round_up(r + p + q, LANE)
    out_w = _round_up(r + p + 2, LANE)

    if tile_n is None:
        tile_n = min(_TILE_N_DEFAULT, _round_up(n, SUBLANE))
    tile_n = _round_up(tile_n, SUBLANE)
    n_pad = _round_up(n, tile_n)
    num_tiles = n_pad // tile_n

    # One lane-dense packed input [Z | X | E | 0]  ->  one wide DMA per tile.
    zin = jnp.concatenate([Z, X, E], axis=1).astype(jnp.float32)
    zin = jnp.pad(zin, ((0, n_pad - n), (0, in_w - (r + p + q))))

    w1, b1, w2, b2, coef = _pack_params(params_G, params_I, d_pad, mlp_dtype)

    cparams = pltpu.CompilerParams(dimension_semantics=("parallel",),
                                   vmem_limit_bytes=_VMEM_LIMIT)
    full2 = lambda i: (0, 0)

    p1 = functools.partial(_pass1_kernel, n=n, tile_n=tile_n, r=r, p=p, q=q,
                           d_tot=d_tot, d_pad=d_pad, mlp_dtype=mlp_dtype)
    res_hbm, stats = pl.pallas_call(
        p1,
        grid=(num_tiles,),
        in_specs=[
            pl.BlockSpec((tile_n, in_w), lambda i: (i, 0)),
            pl.BlockSpec((HIDDEN, d_pad), full2),
            pl.BlockSpec((HIDDEN, d_pad), full2),
            pl.BlockSpec((HIDDEN, d_pad), full2),
            pl.BlockSpec((1, d_pad), full2),
        ],
        out_specs=[
            pl.BlockSpec((tile_n, d_pad), lambda i: (i, 0)),
            pl.BlockSpec((None, 2, d_pad), lambda i: (i, 0, 0)),
        ],
        out_shape=[
            jax.ShapeDtypeStruct((n_pad, d_pad), jnp.float32),
            jax.ShapeDtypeStruct((num_tiles, 2, d_pad), jnp.float32),
        ],
        compiler_params=cparams,
    )(zin, w1, b1, w2, b2)

    # Global BatchNorm statistics (biased variance, eps=1e-5, no affine), coef folded into scale.
    col_sum = jnp.sum(stats[:, 0, :], axis=0, keepdims=True)
    col_sumsq = jnp.sum(stats[:, 1, :], axis=0, keepdims=True)
    mean = col_sum / n
    var = jnp.maximum(col_sumsq / n - mean * mean, 0.0)
    scale = coef * jax.lax.rsqrt(var + 1e-5)

    p2 = functools.partial(_pass2_kernel, tile_n=tile_n, r=r, p=p, q=q, out_w=out_w)
    out = pl.pallas_call(
        p2,
        grid=(num_tiles,),
        in_specs=[
            pl.BlockSpec((tile_n, d_pad), lambda i: (i, 0)),
            pl.BlockSpec((1, d_pad), full2),
            pl.BlockSpec((1, d_pad), full2),
        ],
        out_specs=pl.BlockSpec((tile_n, out_w), lambda i: (i, 0)),
        out_shape=jax.ShapeDtypeStruct((n_pad, out_w), jnp.float32),
        compiler_params=cparams,
    )(res_hbm, mean, scale)

    sep_G = out[:n, :r]
    sep_I = out[:n, r:r + p]
    pred_G = out[:n, r + p:r + p + 1]
    pred_I = out[:n, r + p + 1:r + p + 2]
    return pred_G, sep_G, pred_I, sep_I


def reference_single_modal(g, e, P):
    """Plain-JAX reference mirroring the PyTorch layout (concat / reshape / batchnorm)."""
    n, F = g.shape
    q = e.shape[1]
    w = jnp.einsum('nj,ni->nji', e, g).reshape(n, q * F)
    res0 = jnp.concatenate([g, w, e], axis=1)                                  # [n, D]
    hid = jnp.maximum(P['w1'][None] * res0[:, None, :] + P['b1'][None], 0.0)   # [n, H, D]
    nam = (P['w2'][None] * hid).sum(axis=1) + P['b2']                          # [n, D]
    res = res0 + nam
    mean = res.mean(axis=0, keepdims=True)
    var = ((res - mean) ** 2).mean(axis=0, keepdims=True)
    res = (res - mean) / jnp.sqrt(var + 1e-5) * P['coef']
    pred = res.sum(axis=1, keepdims=True)
    sep = res[:, :(q + 1) * F].reshape(n, q + 1, F).sum(axis=1)
    return pred, sep


if __name__ == "__main__":
    n, r, p, q = 8, 16, 16, 4

    root = jax.random.PRNGKey(0)
    k_z, k_x, k_e, k_pg, k_pi = jax.random.split(root, 5)
    Z = jax.random.normal(k_z, (n, r), jnp.float32)   # G variables
    X = jax.random.normal(k_x, (n, p), jnp.float32)   # I variables
    E = jax.random.normal(k_e, (n, q), jnp.float32)   # E variables

    params_G = make_single_modal_params(k_pg, r, q)
    params_I = make_single_modal_params(k_pi, p, q)

    fwd = jax.jit(model_multi_modal, static_argnames=("tile_n", "mlp_dtype"))

    # --- exact (f32) path ---------------------------------------------------
    outs = jax.block_until_ready(fwd(Z, X, E, params_G, params_I))
    pred_G, pred_G_sep, pred_I, pred_I_sep = outs

    ref_G = reference_single_modal(Z, E, params_G)
    ref_I = reference_single_modal(X, E, params_I)
    np.testing.assert_allclose(np.asarray(pred_G), np.asarray(ref_G[0]), rtol=1e-4, atol=1e-5)
    np.testing.assert_allclose(np.asarray(pred_G_sep), np.asarray(ref_G[1]), rtol=1e-4, atol=1e-5)
    np.testing.assert_allclose(np.asarray(pred_I), np.asarray(ref_I[0]), rtol=1e-4, atol=1e-5)
    np.testing.assert_allclose(np.asarray(pred_I_sep), np.asarray(ref_I[1]), rtol=1e-4, atol=1e-5)
    assert pred_G.shape == (n, 1) and pred_G_sep.shape == (n, r)
    assert pred_I.shape == (n, 1) and pred_I_sep.shape == (n, p)

    # --- bf16-MLP throughput path (v6e/v7x packed VALU); stats/accum stay f32 ---
    outs_bf16 = jax.block_until_ready(fwd(Z, X, E, params_G, params_I, mlp_dtype=jnp.bfloat16))
    for a, b in zip(outs_bf16, outs):
        assert a.shape == b.shape
        assert bool(jnp.all(jnp.isfinite(a)))

    print("KERNEL_OK")
</pallas_src>

<mosaic_0001>
module attributes {stable_mosaic.version = 11 : i64} {
  func.func @_pass2_kernel(%arg0: i32, %arg1: memref<8x256xf32, #tpu.memory_space<vmem>>, %arg2: memref<1x256xf32, #tpu.memory_space<vmem>>, %arg3: memref<1x256xf32, #tpu.memory_space<vmem>>, %arg4: memref<8x128xf32, #tpu.memory_space<vmem>>) attributes {dimension_semantics = [#tpu.dimension_semantics<parallel>], iteration_bounds = array<i64: 1>, scalar_prefetch = 0 : i64, scratch_operands = 0 : i64, tpu.core_type = #tpu.core_type<tc>, window_params = [{transform_indices = @transform_0, window_bounds = array<i64: 8, 256>}, {pipeline_mode = #tpu.pipeline_mode<synchronous>, transform_indices = @transform_1, window_bounds = array<i64: 1, 256>}, {pipeline_mode = #tpu.pipeline_mode<synchronous>, transform_indices = @transform_2, window_bounds = array<i64: 1, 256>}, {transform_indices = @transform_3, window_bounds = array<i64: 8, 128>}]} {
    %c0 = arith.constant 0 : index
    %c0_0 = arith.constant 0 : index
    %0 = vector.load %arg1[%c0, %c0_0] : memref<8x256xf32, #tpu.memory_space<vmem>>, vector<8x256xf32>
    %c0_1 = arith.constant 0 : index
    %c0_2 = arith.constant 0 : index
    %1 = vector.load %arg2[%c0_1, %c0_2] : memref<1x256xf32, #tpu.memory_space<vmem>>, vector<1x256xf32>
    %2 = vector.broadcast %1 : vector<1x256xf32> to vector<8x256xf32>
    %3 = arith.subf %0, %2 : vector<8x256xf32>
    %c0_3 = arith.constant 0 : index
    %c0_4 = arith.constant 0 : index
    %4 = vector.load %arg3[%c0_3, %c0_4] : memref<1x256xf32, #tpu.memory_space<vmem>>, vector<1x256xf32>
    %5 = vector.broadcast %4 : vector<1x256xf32> to vector<8x256xf32>
    %6 = arith.mulf %3, %5 : vector<8x256xf32>
    %7 = vector.extract_strided_slice %6 {offsets = [0, 0], sizes = [8, 16], strides = [1, 1]} : vector<8x256xf32> to vector<8x16xf32>
    %8 = vector.extract_strided_slice %6 {offsets = [0, 16], sizes = [8, 16], strides = [1, 1]} : vector<8x256xf32> to vector<8x16xf32>
    %9 = arith.addf %7, %8 : vector<8x16xf32>
    %10 = vector.extract_strided_slice %6 {offsets = [0, 32], sizes = [8, 16], strides = [1, 1]} : vector<8x256xf32> to vector<8x16xf32>
    %11 = arith.addf %9, %10 : vector<8x16xf32>
    %12 = vector.extract_strided_slice %6 {offsets = [0, 48], sizes = [8, 16], strides = [1, 1]} : vector<8x256xf32> to vector<8x16xf32>
    %13 = arith.addf %11, %12 : vector<8x16xf32>
    %14 = vector.extract_strided_slice %6 {offsets = [0, 64], sizes = [8, 16], strides = [1, 1]} : vector<8x256xf32> to vector<8x16xf32>
    %15 = arith.addf %13, %14 : vector<8x16xf32>
    %cst = arith.constant dense<0.000000e+00> : vector<8xf32>
    %16 = vector.multi_reduction <add>, %15, %cst [1] : vector<8x16xf32> to vector<8xf32>
    %17 = vector.shape_cast %16 : vector<8xf32> to vector<8x1xf32>
    %18 = vector.extract_strided_slice %6 {offsets = [0, 80], sizes = [8, 4], strides = [1, 1]} : vector<8x256xf32> to vector<8x4xf32>
    %cst_5 = arith.constant dense<0.000000e+00> : vector<8xf32>
    %19 = vector.multi_reduction <add>, %18, %cst_5 [1] : vector<8x4xf32> to vector<8xf32>
    %20 = vector.shape_cast %19 : vector<8xf32> to vector<8x1xf32>
    %21 = arith.addf %17, %20 : vector<8x1xf32>
    %22 = vector.extract_strided_slice %6 {offsets = [0, 84], sizes = [8, 16], strides = [1, 1]} : vector<8x256xf32> to vector<8x16xf32>
    %23 = vector.extract_strided_slice %6 {offsets = [0, 100], sizes = [8, 16], strides = [1, 1]} : vector<8x256xf32> to vector<8x16xf32>
    %24 = arith.addf %22, %23 : vector<8x16xf32>
    %25 = vector.extract_strided_slice %6 {offsets = [0, 116], sizes = [8, 16], strides = [1, 1]} : vector<8x256xf32> to vector<8x16xf32>
    %26 = arith.addf %24, %25 : vector<8x16xf32>
    %27 = vector.extract_strided_slice %6 {offsets = [0, 132], sizes = [8, 16], strides = [1, 1]} : vector<8x256xf32> to vector<8x16xf32>
    %28 = arith.addf %26, %27 : vector<8x16xf32>
    %29 = vector.extract_strided_slice %6 {offsets = [0, 148], sizes = [8, 16], strides = [1, 1]} : vector<8x256xf32> to vector<8x16xf32>
    %30 = arith.addf %28, %29 : vector<8x16xf32>
    %cst_6 = arith.constant dense<0.000000e+00> : vector<8xf32>
    %31 = vector.multi_reduction <add>, %30, %cst_6 [1] : vector<8x16xf32> to vector<8xf32>
    %32 = vector.shape_cast %31 : vector<8xf32> to vector<8x1xf32>
    %33 = vector.extract_strided_slice %6 {offsets = [0, 164], sizes = [8, 4], strides = [1, 1]} : vector<8x256xf32> to vector<8x4xf32>
    %cst_7 = arith.constant dense<0.000000e+00> : vector<8xf32>
    %34 = vector.multi_reduction <add>, %33, %cst_7 [1] : vector<8x4xf32> to vector<8xf32>
    %35 = vector.shape_cast %34 : vector<8xf32> to vector<8x1xf32>
    %36 = arith.addf %32, %35 : vector<8x1xf32>
    %c0_8 = arith.constant 0 : index
    %c0_9 = arith.constant 0 : index
    %37 = vector.load %arg4[%c0_8, %c0_9] : memref<8x128xf32, #tpu.memory_space<vmem>>, vector<8x16xf32>
    tpu.vector_store %arg4[%c0_8, %c0_9], %15 {strides = array<i32>} : memref<8x128xf32, #tpu.memory_space<vmem>>, vector<8x16xf32>,
    %c0_10 = arith.constant 0 : index
    %c16 = arith.constant 16 : index
    %38 = vector.load %arg4[%c0_10, %c16] : memref<8x128xf32, #tpu.memory_space<vmem>>, vector<8x16xf32>
    tpu.vector_store %arg4[%c0_10, %c16], %30 {strides = array<i32>} : memref<8x128xf32, #tpu.memory_space<vmem>>, vector<8x16xf32>,
    %c0_11 = arith.constant 0 : index
    %c32 = arith.constant 32 : index
    %39 = vector.load %arg4[%c0_11, %c32] : memref<8x128xf32, #tpu.memory_space<vmem>>, vector<8x1xf32>
    tpu.vector_store %arg4[%c0_11, %c32], %21 {strides = array<i32>} : memref<8x128xf32, #tpu.memory_space<vmem>>, vector<8x1xf32>,
    %c0_12 = arith.constant 0 : index
    %c33 = arith.constant 33 : index
    %40 = vector.load %arg4[%c0_12, %c33] : memref<8x128xf32, #tpu.memory_space<vmem>>, vector<8x1xf32>
    tpu.vector_store %arg4[%c0_12, %c33], %36 {strides = array<i32>} : memref<8x128xf32, #tpu.memory_space<vmem>>, vector<8x1xf32>,
    %cst_13 = arith.constant 0.000000e+00 : f32
    %41 = vector.broadcast %cst_13 : f32 to vector<8x94xf32>
    %c0_14 = arith.constant 0 : index
    %c34 = arith.constant 34 : index
    %42 = vector.load %arg4[%c0_14, %c34] : memref<8x128xf32, #tpu.memory_space<vmem>>, vector<8x94xf32>
    tpu.vector_store %arg4[%c0_14, %c34], %41 {strides = array<i32>} : memref<8x128xf32, #tpu.memory_space<vmem>>, vector<8x94xf32>,
    return
  }
  func.func @transform_0(%arg0: i32) -> (i32, i32) {
    %c0_i32 = arith.constant 0 : i32
    %c0_i32_0 = arith.constant 0 : i32
    return %arg0, %c0_i32 : i32, i32
  }
  func.func @transform_1(%arg0: i32) -> (i32, i32) {
    %c0_i32 = arith.constant 0 : i32
    %c0_i32_0 = arith.constant 0 : i32
    %c0_i32_1 = arith.constant 0 : i32
    return %c0_i32, %c0_i32_0 : i32, i32
  }
  func.func @transform_2(%arg0: i32) -> (i32, i32) {
    %c0_i32 = arith.constant 0 : i32
    %c0_i32_0 = arith.constant 0 : i32
    %c0_i32_1 = arith.constant 0 : i32
    return %c0_i32, %c0_i32_0 : i32, i32
  }
  func.func @transform_3(%arg0: i32) -> (i32, i32) {
    %c0_i32 = arith.constant 0 : i32
    %c0_i32_0 = arith.constant 0 : i32
    return %arg0, %c0_i32 : i32, i32
  }
}

module attributes {stable_mosaic.version = 11 : i64} {
  func.func @_pass1_kernel(%arg0: i32, %arg1: memref<8x128xf32, #tpu.memory_space<vmem>>, %arg2: memref<10x256xf32, #tpu.memory_space<vmem>>, %arg3: memref<10x256xf32, #tpu.memory_space<vmem>>, %arg4: memref<10x256xf32, #tpu.memory_space<vmem>>, %arg5: memref<1x256xf32, #tpu.memory_space<vmem>>, %arg6: memref<8x256xf32, #tpu.memory_space<vmem>>, %arg7: memref<1x2x256xf32, #tpu.memory_space<vmem>>) attributes {dimension_semantics = [#tpu.dimension_semantics<parallel>], iteration_bounds = array<i64: 1>, scalar_prefetch = 0 : i64, scratch_operands = 0 : i64, tpu.core_type = #tpu.core_type<tc>, window_params = [{transform_indices = @transform_0, window_bounds = array<i64: 8, 128>}, {pipeline_mode = #tpu.pipeline_mode<synchronous>, transform_indices = @transform_1, window_bounds = array<i64: 10, 256>}, {pipeline_mode = #tpu.pipeline_mode<synchronous>, transform_indices = @transform_2, window_bounds = array<i64: 10, 256>}, {pipeline_mode = #tpu.pipeline_mode<synchronous>, transform_indices = @transform_3, window_bounds = array<i64: 10, 256>}, {pipeline_mode = #tpu.pipeline_mode<synchronous>, transform_indices = @transform_4, window_bounds = array<i64: 1, 256>}, {transform_indices = @transform_5, window_bounds = array<i64: 8, 256>}, {transform_indices = @transform_6, window_bounds = array<i64: 1, 2, 256>}]} {
    %c0 = arith.constant 0 : index
    %c0_0 = arith.constant 0 : index
    %0 = vector.load %arg1[%c0, %c0_0] : memref<8x128xf32, #tpu.memory_space<vmem>>, vector<8x128xf32>
    %1 = vector.extract_strided_slice %0 {offsets = [0, 0], sizes = [8, 16], strides = [1, 1]} : vector<8x128xf32> to vector<8x16xf32>
    %2 = vector.extract_strided_slice %0 {offsets = [0, 16], sizes = [8, 16], strides = [1, 1]} : vector<8x128xf32> to vector<8x16xf32>
    %3 = vector.extract_strided_slice %0 {offsets = [0, 32], sizes = [8, 4], strides = [1, 1]} : vector<8x128xf32> to vector<8x4xf32>
    %c0_1 = arith.constant 0 : index
    %c0_2 = arith.constant 0 : index
    %4 = vector.load %arg6[%c0_1, %c0_2] : memref<8x256xf32, #tpu.memory_space<vmem>>, vector<8x16xf32>
    tpu.vector_store %arg6[%c0_1, %c0_2], %1 {strides = array<i32>} : memref<8x256xf32, #tpu.memory_space<vmem>>, vector<8x16xf32>,
    %5 = vector.extract_strided_slice %3 {offsets = [0, 0], sizes = [8, 1], strides = [1, 1]} : vector<8x4xf32> to vector<8x1xf32>
    %6 = vector.broadcast %5 : vector<8x1xf32> to vector<8x16xf32>
    %7 = arith.mulf %1, %6 : vector<8x16xf32>
    %c0_3 = arith.constant 0 : index
    %c16 = arith.constant 16 : index
    %8 = vector.load %arg6[%c0_3, %c16] : memref<8x256xf32, #tpu.memory_space<vmem>>, vector<8x16xf32>
    tpu.vector_store %arg6[%c0_3, %c16], %7 {strides = array<i32>} : memref<8x256xf32, #tpu.memory_space<vmem>>, vector<8x16xf32>,
    %9 = vector.extract_strided_slice %3 {offsets = [0, 1], sizes = [8, 1], strides = [1, 1]} : vector<8x4xf32> to vector<8x1xf32>
    %10 = vector.broadcast %9 : vector<8x1xf32> to vector<8x16xf32>
    %11 = arith.mulf %1, %10 : vector<8x16xf32>
    %c0_4 = arith.constant 0 : index
    %c32 = arith.constant 32 : index
    %12 = vector.load %arg6[%c0_4, %c32] : memref<8x256xf32, #tpu.memory_space<vmem>>, vector<8x16xf32>
    tpu.vector_store %arg6[%c0_4, %c32], %11 {strides = array<i32>} : memref<8x256xf32, #tpu.memory_space<vmem>>, vector<8x16xf32>,
    %13 = vector.extract_strided_slice %3 {offsets = [0, 2], sizes = [8, 1], strides = [1, 1]} : vector<8x4xf32> to vector<8x1xf32>
    %14 = vector.broadcast %13 : vector<8x1xf32> to vector<8x16xf32>
    %15 = arith.mulf %1, %14 : vector<8x16xf32>
    %c0_5 = arith.constant 0 : index
    %c48 = arith.constant 48 : index
    %16 = vector.load %arg6[%c0_5, %c48] : memref<8x256xf32, #tpu.memory_space<vmem>>, vector<8x16xf32>
    tpu.vector_store %arg6[%c0_5, %c48], %15 {strides = array<i32>} : memref<8x256xf32, #tpu.memory_space<vmem>>, vector<8x16xf32>,
    %17 = vector.extract_strided_slice %3 {offsets = [0, 3], sizes = [8, 1], strides = [1, 1]} : vector<8x4xf32> to vector<8x1xf32>
    %18 = vector.broadcast %17 : vector<8x1xf32> to vector<8x16xf32>
    %19 = arith.mulf %1, %18 : vector<8x16xf32>
    %c0_6 = arith.constant 0 : index
    %c64 = arith.constant 64 : index
    %20 = vector.load %arg6[%c0_6, %c64] : memref<8x256xf32, #tpu.memory_space<vmem>>, vector<8x16xf32>
    tpu.vector_store %arg6[%c0_6, %c64], %19 {strides = array<i32>} : memref<8x256xf32, #tpu.memory_space<vmem>>, vector<8x16xf32>,
    %c0_7 = arith.constant 0 : index
    %c80 = arith.constant 80 : index
    %21 = vector.load %arg6[%c0_7, %c80] : memref<8x256xf32, #tpu.memory_space<vmem>>, vector<8x4xf32>
    tpu.vector_store %arg6[%c0_7, %c80], %3 {strides = array<i32>} : memref<8x256xf32, #tpu.memory_space<vmem>>, vector<8x4xf32>,
    %c0_8 = arith.constant 0 : index
    %c84 = arith.constant 84 : index
    %22 = vector.load %arg6[%c0_8, %c84] : memref<8x256xf32, #tpu.memory_space<vmem>>, vector<8x16xf32>
    tpu.vector_store %arg6[%c0_8, %c84], %2 {strides = array<i32>} : memref<8x256xf32, #tpu.memory_space<vmem>>, vector<8x16xf32>,
    %23 = vector.extract_strided_slice %3 {offsets = [0, 0], sizes = [8, 1], strides = [1, 1]} : vector<8x4xf32> to vector<8x1xf32>
    %24 = vector.broadcast %23 : vector<8x1xf32> to vector<8x16xf32>
    %25 = arith.mulf %2, %24 : vector<8x16xf32>
    %c0_9 = arith.constant 0 : index
    %c100 = arith.constant 100 : index
    %26 = vector.load %arg6[%c0_9, %c100] : memref<8x256xf32, #tpu.memory_space<vmem>>, vector<8x16xf32>
    tpu.vector_store %arg6[%c0_9, %c100], %25 {strides = array<i32>} : memref<8x256xf32, #tpu.memory_space<vmem>>, vector<8x16xf32>,
    %27 = vector.extract_strided_slice %3 {offsets = [0, 1], sizes = [8, 1], strides = [1, 1]} : vector<8x4xf32> to vector<8x1xf32>
    %28 = vector.broadcast %27 : vector<8x1xf32> to vector<8x16xf32>
    %29 = arith.mulf %2, %28 : vector<8x16xf32>
    %c0_10 = arith.constant 0 : index
    %c116 = arith.constant 116 : index
    %30 = vector.load %arg6[%c0_10, %c116] : memref<8x256xf32, #tpu.memory_space<vmem>>, vector<8x16xf32>
    tpu.vector_store %arg6[%c0_10, %c116], %29 {strides = array<i32>} : memref<8x256xf32, #tpu.memory_space<vmem>>, vector<8x16xf32>,
    %31 = vector.extract_strided_slice %3 {offsets = [0, 2], sizes = [8, 1], strides = [1, 1]} : vector<8x4xf32> to vector<8x1xf32>
    %32 = vector.broadcast %31 : vector<8x1xf32> to vector<8x16xf32>
    %33 = arith.mulf %2, %32 : vector<8x16xf32>
    %c0_11 = arith.constant 0 : index
    %c132 = arith.constant 132 : index
    %34 = vector.load %arg6[%c0_11, %c132] : memref<8x256xf32, #tpu.memory_space<vmem>>, vector<8x16xf32>
    tpu.vector_store %arg6[%c0_11, %c132], %33 {strides = array<i32>} : memref<8x256xf32, #tpu.memory_space<vmem>>, vector<8x16xf32>,
    %35 = vector.extract_strided_slice %3 {offsets = [0, 3], sizes = [8, 1], strides = [1, 1]} : vector<8x4xf32> to vector<8x1xf32>
    %36 = vector.broadcast %35 : vector<8x1xf32> to vector<8x16xf32>
    %37 = arith.mulf %2, %36 : vector<8x16xf32>
    %c0_12 = arith.constant 0 : index
    %c148 = arith.constant 148 : index
    %38 = vector.load %arg6[%c0_12, %c148] : memref<8x256xf32, #tpu.memory_space<vmem>>, vector<8x16xf32>
    tpu.vector_store %arg6[%c0_12, %c148], %37 {strides = array<i32>} : memref<8x256xf32, #tpu.memory_space<vmem>>, vector<8x16xf32>,
    %c0_13 = arith.constant 0 : index
    %c164 = arith.constant 164 : index
    %39 = vector.load %arg6[%c0_13, %c164] : memref<8x256xf32, #tpu.memory_space<vmem>>, vector<8x4xf32>
    tpu.vector_store %arg6[%c0_13, %c164], %3 {strides = array<i32>} : memref<8x256xf32, #tpu.memory_space<vmem>>, vector<8x4xf32>,
    %cst = arith.constant 0.000000e+00 : f32
    %40 = vector.broadcast %cst : f32 to vector<8x88xf32>
    %c0_14 = arith.constant 0 : index
    %c168 = arith.constant 168 : index
    %41 = vector.load %arg6[%c0_14, %c168] : memref<8x256xf32, #tpu.memory_space<vmem>>, vector<8x88xf32>
    tpu.vector_store %arg6[%c0_14, %c168], %40 {strides = array<i32>} : memref<8x256xf32, #tpu.memory_space<vmem>>, vector<8x88xf32>,
    %c0_15 = arith.constant 0 : index
    %c0_16 = arith.constant 0 : index
    %42 = vector.load %arg6[%c0_15, %c0_16] : memref<8x256xf32, #tpu.memory_space<vmem>>, vector<8x256xf32>
    %c0_17 = arith.constant 0 : index
    %c0_18 = arith.constant 0 : index
    %43 = vector.load %arg5[%c0_17, %c0_18] : memref<1x256xf32, #tpu.memory_space<vmem>>, vector<1x256xf32>
    %c0_19 = arith.constant 0 : index
    %c0_20 = arith.constant 0 : index
    %44 = vector.load %arg2[%c0_19, %c0_20] : memref<10x256xf32, #tpu.memory_space<vmem>>, vector<1x256xf32>
    %45 = vector.broadcast %44 : vector<1x256xf32> to vector<8x256xf32>
    %46 = arith.mulf %45, %42 : vector<8x256xf32>
    %c0_21 = arith.constant 0 : index
    %c0_22 = arith.constant 0 : index
    %47 = vector.load %arg3[%c0_21, %c0_22] : memref<10x256xf32, #tpu.memory_space<vmem>>, vector<1x256xf32>
    %48 = vector.broadcast %47 : vector<1x256xf32> to vector<8x256xf32>
    %49 = arith.addf %46, %48 : vector<8x256xf32>
    %cst_23 = arith.constant 0.000000e+00 : f32
    %50 = vector.broadcast %cst_23 : f32 to vector<8x256xf32>
    %51 = arith.maximumf %49, %50 : vector<8x256xf32>
    %c0_24 = arith.constant 0 : index
    %c0_25 = arith.constant 0 : index
    %52 = vector.load %arg4[%c0_24, %c0_25] : memref<10x256xf32, #tpu.memory_space<vmem>>, vector<1x256xf32>
    %53 = vector.broadcast %52 : vector<1x256xf32> to vector<8x256xf32>
    %54 = arith.mulf %53, %51 : vector<8x256xf32>
    %55 = vector.broadcast %43 : vector<1x256xf32> to vector<8x256xf32>
    %56 = arith.addf %55, %54 : vector<8x256xf32>
    %c1 = arith.constant 1 : index
    %c0_26 = arith.constant 0 : index
    %57 = vector.load %arg2[%c1, %c0_26] : memref<10x256xf32, #tpu.memory_space<vmem>>, vector<1x256xf32>
    %58 = vector.broadcast %57 : vector<1x256xf32> to vector<8x256xf32>
    %59 = arith.mulf %58, %42 : vector<8x256xf32>
    %c1_27 = arith.constant 1 : index
    %c0_28 = arith.constant 0 : index
    %60 = vector.load %arg3[%c1_27, %c0_28] : memref<10x256xf32, #tpu.memory_space<vmem>>, vector<1x256xf32>
    %61 = vector.broadcast %60 : vector<1x256xf32> to vector<8x256xf32>
    %62 = arith.addf %59, %61 : vector<8x256xf32>
    %cst_29 = arith.constant 0.000000e+00 : f32
    %63 = vector.broadcast %cst_29 : f32 to vector<8x256xf32>
    %64 = arith.maximumf %62, %63 : vector<8x256xf32>
    %c1_30 = arith.constant 1 : index
    %c0_31 = arith.constant 0 : index
    %65 = vector.load %arg4[%c1_30, %c0_31] : memref<10x256xf32, #tpu.memory_space<vmem>>, vector<1x256xf32>
    %66 = vector.broadcast %65 : vector<1x256xf32> to vector<8x256xf32>
    %67 = arith.mulf %66, %64 : vector<8x256xf32>
    %68 = arith.addf %56, %67 : vector<8x256xf32>
    %c2 = arith.constant 2 : index
    %c0_32 = arith.constant 0 : index
    %69 = vector.load %arg2[%c2, %c0_32] : memref<10x256xf32, #tpu.memory_space<vmem>>, vector<1x256xf32>
    %70 = vector.broadcast %69 : vector<1x256xf32> to vector<8x256xf32>
    %71 = arith.mulf %70, %42 : vector<8x256xf32>
    %c2_33 = arith.constant 2 : index
    %c0_34 = arith.constant 0 : index
    %72 = vector.load %arg3[%c2_33, %c0_34] : memref<10x256xf32, #tpu.memory_space<vmem>>, vector<1x256xf32>
    %73 = vector.broadcast %72 : vector<1x256xf32> to vector<8x256xf32>
    %74 = arith.addf %71, %73 : vector<8x256xf32>
    %cst_35 = arith.constant 0.000000e+00 : f32
    %75 = vector.broadcast %cst_35 : f32 to vector<8x256xf32>
    %76 = arith.maximumf %74, %75 : vector<8x256xf32>
    %c2_36 = arith.constant 2 : index
    %c0_37 = arith.constant 0 : index
    %77 = vector.load %arg4[%c2_36, %c0_37] : memref<10x256xf32, #tpu.memory_space<vmem>>, vector<1x256xf32>
    %78 = vector.broadcast %77 : vector<1x256xf32> to vector<8x256xf32>
    %79 = arith.mulf %78, %76 : vector<8x256xf32>
    %80 = arith.addf %68, %79 : vector<8x256xf32>
    %c3 = arith.constant 3 : index
    %c0_38 = arith.constant 0 : index
    %81 = vector.load %arg2[%c3, %c0_38] : memref<10x256xf32, #tpu.memory_space<vmem>>, vector<1x256xf32>
    %82 = vector.broadcast %81 : vector<1x256xf32> to vector<8x256xf32>
    %83 = arith.mulf %82, %42 : vector<8x256xf32>
    %c3_39 = arith.constant 3 : index
    %c0_40 = arith.constant 0 : index
    %84 = vector.load %arg3[%c3_39, %c0_40] : memref<10x256xf32, #tpu.memory_space<vmem>>, vector<1x256xf32>
    %85 = vector.broadcast %84 : vector<1x256xf32> to vector<8x256xf32>
    %86 = arith.addf %83, %85 : vector<8x256xf32>
    %cst_41 = arith.constant 0.000000e+00 : f32
    %87 = vector.broadcast %cst_41 : f32 to vector<8x256xf32>
    %88 = arith.maximumf %86, %87 : vector<8x256xf32>
    %c3_42 = arith.constant 3 : index
    %c0_43 = arith.constant 0 : index
    %89 = vector.load %arg4[%c3_42, %c0_43] : memref<10x256xf32, #tpu.memory_space<vmem>>, vector<1x256xf32>
    %90 = vector.broadcast %89 : vector<1x256xf32> to vector<8x256xf32>
    %91 = arith.mulf %90, %88 : vector<8x256xf32>
    %92 = arith.addf %80, %91 : vector<8x256xf32>
    %c4 = arith.constant 4 : index
    %c0_44 = arith.constant 0 : index
    %93 = vector.load %arg2[%c4, %c0_44] : memref<10x256xf32, #tpu.memory_space<vmem>>, vector<1x256xf32>
    %94 = vector.broadcast %93 : vector<1x256xf32> to vector<8x256xf32>
    %95 = arith.mulf %94, %42 : vector<8x256xf32>
    %c4_45 = arith.constant 4 : index
    %c0_46 = arith.constant 0 : index
    %96 = vector.load %arg3[%c4_45, %c0_46] : memref<10x256xf32, #tpu.memory_space<vmem>>, vector<1x256xf32>
    %97 = vector.broadcast %96 : vector<1x256xf32> to vector<8x256xf32>
    %98 = arith.addf %95, %97 : vector<8x256xf32>
    %cst_47 = arith.constant 0.000000e+00 : f32
    %99 = vector.broadcast %cst_47 : f32 to vector<8x256xf32>
    %100 = arith.maximumf %98, %99 : vector<8x256xf32>
    %c4_48 = arith.constant 4 : index
    %c0_49 = arith.constant 0 : index
    %101 = vector.load %arg4[%c4_48, %c0_49] : memref<10x256xf32, #tpu.memory_space<vmem>>, vector<1x256xf32>
    %102 = vector.broadcast %101 : vector<1x256xf32> to vector<8x256xf32>
    %103 = arith.mulf %102, %100 : vector<8x256xf32>
    %104 = arith.addf %92, %103 : vector<8x256xf32>
    %c5 = arith.constant 5 : index
    %c0_50 = arith.constant 0 : index
    %105 = vector.load %arg2[%c5, %c0_50] : memref<10x256xf32, #tpu.memory_space<vmem>>, vector<1x256xf32>
    %106 = vector.broadcast %105 : vector<1x256xf32> to vector<8x256xf32>
    %107 = arith.mulf %106, %42 : vector<8x256xf32>
    %c5_51 = arith.constant 5 : index
    %c0_52 = arith.constant 0 : index
    %108 = vector.load %arg3[%c5_51, %c0_52] : memref<10x256xf32, #tpu.memory_space<vmem>>, vector<1x256xf32>
    %109 = vector.broadcast %108 : vector<1x256xf32> to vector<8x256xf32>
    %110 = arith.addf %107, %109 : vector<8x256xf32>
    %cst_53 = arith.constant 0.000000e+00 : f32
    %111 = vector.broadcast %cst_53 : f32 to vector<8x256xf32>
    %112 = arith.maximumf %110, %111 : vector<8x256xf32>
    %c5_54 = arith.constant 5 : index
    %c0_55 = arith.constant 0 : index
    %113 = vector.load %arg4[%c5_54, %c0_55] : memref<10x256xf32, #tpu.memory_space<vmem>>, vector<1x256xf32>
    %114 = vector.broadcast %113 : vector<1x256xf32> to vector<8x256xf32>
    %115 = arith.mulf %114, %112 : vector<8x256xf32>
    %116 = arith.addf %104, %115 : vector<8x256xf32>
    %c6 = arith.constant 6 : index
    %c0_56 = arith.constant 0 : index
    %117 = vector.load %arg2[%c6, %c0_56] : memref<10x256xf32, #tpu.memory_space<vmem>>, vector<1x256xf32>
    %118 = vector.broadcast %117 : vector<1x256xf32> to vector<8x256xf32>
    %119 = arith.mulf %118, %42 : vector<8x256xf32>
    %c6_57 = arith.constant 6 : index
    %c0_58 = arith.constant 0 : index
    %120 = vector.load %arg3[%c6_57, %c0_58] : memref<10x256xf32, #tpu.memory_space<vmem>>, vector<1x256xf32>
    %121 = vector.broadcast %120 : vector<1x256xf32> to vector<8x256xf32>
    %122 = arith.addf %119, %121 : vector<8x256xf32>
    %cst_59 = arith.constant 0.000000e+00 : f32
    %123 = vector.broadcast %cst_59 : f32 to vector<8x256xf32>
    %124 = arith.maximumf %122, %123 : vector<8x256xf32>
    %c6_60 = arith.constant 6 : index
    %c0_61 = arith.constant 0 : index
    %125 = vector.load %arg4[%c6_60, %c0_61] : memref<10x256xf32, #tpu.memory_space<vmem>>, vector<1x256xf32>
    %126 = vector.broadcast %125 : vector<1x256xf32> to vector<8x256xf32>
    %127 = arith.mulf %126, %124 : vector<8x256xf32>
    %128 = arith.addf %116, %127 : vector<8x256xf32>
    %c7 = arith.constant 7 : index
    %c0_62 = arith.constant 0 : index
    %129 = vector.load %arg2[%c7, %c0_62] : memref<10x256xf32, #tpu.memory_space<vmem>>, vector<1x256xf32>
    %130 = vector.broadcast %129 : vector<1x256xf32> to vector<8x256xf32>
    %131 = arith.mulf %130, %42 : vector<8x256xf32>
    %c7_63 = arith.constant 7 : index
    %c0_64 = arith.constant 0 : index
    %132 = vector.load %arg3[%c7_63, %c0_64] : memref<10x256xf32, #tpu.memory_space<vmem>>, vector<1x256xf32>
    %133 = vector.broadcast %132 : vector<1x256xf32> to vector<8x256xf32>
    %134 = arith.addf %131, %133 : vector<8x256xf32>
    %cst_65 = arith.constant 0.000000e+00 : f32
    %135 = vector.broadcast %cst_65 : f32 to vector<8x256xf32>
    %136 = arith.maximumf %134, %135 : vector<8x256xf32>
    %c7_66 = arith.constant 7 : index
    %c0_67 = arith.constant 0 : index
    %137 = vector.load %arg4[%c7_66, %c0_67] : memref<10x256xf32, #tpu.memory_space<vmem>>, vector<1x256xf32>
    %138 = vector.broadcast %137 : vector<1x256xf32> to vector<8x256xf32>
    %139 = arith.mulf %138, %136 : vector<8x256xf32>
    %140 = arith.addf %128, %139 : vector<8x256xf32>
    %c8 = arith.constant 8 : index
    %c0_68 = arith.constant 0 : index
    %141 = vector.load %arg2[%c8, %c0_68] : memref<10x256xf32, #tpu.memory_space<vmem>>, vector<1x256xf32>
    %142 = vector.broadcast %141 : vector<1x256xf32> to vector<8x256xf32>
    %143 = arith.mulf %142, %42 : vector<8x256xf32>
    %c8_69 = arith.constant 8 : index
    %c0_70 = arith.constant 0 : index
    %144 = vector.load %arg3[%c8_69, %c0_70] : memref<10x256xf32, #tpu.memory_space<vmem>>, vector<1x256xf32>
    %145 = vector.broadcast %144 : vector<1x256xf32> to vector<8x256xf32>
    %146 = arith.addf %143, %145 : vector<8x256xf32>
    %cst_71 = arith.constant 0.000000e+00 : f32
    %147 = vector.broadcast %cst_71 : f32 to vector<8x256xf32>
    %148 = arith.maximumf %146, %147 : vector<8x256xf32>
    %c8_72 = arith.constant 8 : index
    %c0_73 = arith.constant 0 : index
    %149 = vector.load %arg4[%c8_72, %c0_73] : memref<10x256xf32, #tpu.memory_space<vmem>>, vector<1x256xf32>
    %150 = vector.broadcast %149 : vector<1x256xf32> to vector<8x256xf32>
    %151 = arith.mulf %150, %148 : vector<8x256xf32>
    %152 = arith.addf %140, %151 : vector<8x256xf32>
    %c9 = arith.constant 9 : index
    %c0_74 = arith.constant 0 : index
    %153 = vector.load %arg2[%c9, %c0_74] : memref<10x256xf32, #tpu.memory_space<vmem>>, vector<1x256xf32>
    %154 = vector.broadcast %153 : vector<1x256xf32> to vector<8x256xf32>
    %155 = arith.mulf %154, %42 : vector<8x256xf32>
    %c9_75 = arith.constant 9 : index
    %c0_76 = arith.constant 0 : index
    %156 = vector.load %arg3[%c9_75, %c0_76] : memref<10x256xf32, #tpu.memory_space<vmem>>, vector<1x256xf32>
    %157 = vector.broadcast %156 : vector<1x256xf32> to vector<8x256xf32>
    %158 = arith.addf %155, %157 : vector<8x256xf32>
    %cst_77 = arith.constant 0.000000e+00 : f32
    %159 = vector.broadcast %cst_77 : f32 to vector<8x256xf32>
    %160 = arith.maximumf %158, %159 : vector<8x256xf32>
    %c9_78 = arith.constant 9 : index
    %c0_79 = arith.constant 0 : index
    %161 = vector.load %arg4[%c9_78, %c0_79] : memref<10x256xf32, #tpu.memory_space<vmem>>, vector<1x256xf32>
    %162 = vector.broadcast %161 : vector<1x256xf32> to vector<8x256xf32>
    %163 = arith.mulf %162, %160 : vector<8x256xf32>
    %164 = arith.addf %152, %163 : vector<8x256xf32>
    %165 = arith.addf %42, %164 : vector<8x256xf32>
    %c0_80 = arith.constant 0 : index
    %c0_81 = arith.constant 0 : index
    %166 = vector.load %arg6[%c0_80, %c0_81] : memref<8x256xf32, #tpu.memory_space<vmem>>, vector<8x256xf32>
    tpu.vector_store %arg6[%c0_80, %c0_81], %165 {strides = array<i32>} : memref<8x256xf32, #tpu.memory_space<vmem>>, vector<8x256xf32>,
    %c8_i32 = arith.constant 8 : i32
    %167 = arith.muli %arg0, %c8_i32 : i32
    %168 = tpu.iota {dimensions = array<i32: 0>} : vector<8x1xi32>
    %169 = vector.broadcast %167 : i32 to vector<8x1xi32>
    %170 = arith.addi %169, %168 : vector<8x1xi32>
    %c8_i32_82 = arith.constant 8 : i32
    %171 = vector.broadcast %c8_i32_82 : i32 to vector<8x1xi32>
    %172 = arith.cmpi slt, %170, %171 : vector<8x1xi32>
    %173 = arith.extui %172 : vector<8x1xi1> to vector<8x1xi32>
    %174 = arith.sitofp %173 : vector<8x1xi32> to vector<8x1xf32>
    %175 = vector.broadcast %174 : vector<8x1xf32> to vector<8x256xf32>
    %176 = arith.mulf %165, %175 : vector<8x256xf32>
    %cst_83 = arith.constant dense<0.000000e+00> : vector<256xf32>
    %177 = vector.multi_reduction <add>, %176, %cst_83 [0] : vector<8x256xf32> to vector<256xf32>
    %178 = vector.shape_cast %177 : vector<256xf32> to vector<1x256xf32>
    %c0_84 = arith.constant 0 : index
    %c0_85 = arith.constant 0 : index
    %c0_86 = arith.constant 0 : index
    %179 = vector.load %arg7[%c0_84, %c0_85, %c0_86] : memref<1x2x256xf32, #tpu.memory_space<vmem>>, vector<1x1x256xf32>
    %180 = vector.shape_cast %179 : vector<1x1x256xf32> to vector<1x256xf32>
    %181 = vector.shape_cast %178 : vector<1x256xf32> to vector<1x1x256xf32>
    tpu.vector_store %arg7[%c0_84, %c0_85, %c0_86], %181 {strides = array<i32>} : memref<1x2x256xf32, #tpu.memory_space<vmem>>, vector<1x1x256xf32>,
    %182 = arith.mulf %176, %165 : vector<8x256xf32>
    %cst_87 = arith.constant dense<0.000000e+00> : vector<256xf32>
    %183 = vector.multi_reduction <add>, %182, %cst_87 [0] : vector<8x256xf32> to vector<256xf32>
    %184 = vector.shape_cast %183 : vector<256xf32> to vector<1x256xf32>
    %c0_88 = arith.constant 0 : index
    %c1_89 = arith.constant 1 : index
    %c0_90 = arith.constant 0 : index
    %185 = vector.load %arg7[%c0_88, %c1_89, %c0_90] : memref<1x2x256xf32, #tpu.memory_space<vmem>>, vector<1x1x256xf32>
    %186 = vector.shape_cast %185 : vector<1x1x256xf32> to vector<1x256xf32>
    %187 = vector.shape_cast %184 : vector<1x256xf32> to vector<1x1x256xf32>
    tpu.vector_store %arg7[%c0_88, %c1_89, %c0_90], %187 {strides = array<i32>} : memref<1x2x256xf32, #tpu.memory_space<vmem>>, vector<1x1x256xf32>,
    return
  }
  func.func @transform_0(%arg0: i32) -> (i32, i32) {
    %c0_i32 = arith.constant 0 : i32
    %c0_i32_0 = arith.constant 0 : i32
    return %arg0, %c0_i32 : i32, i32
  }
  func.func @transform_1(%arg0: i32) -> (i32, i32) {
    %c0_i32 = arith.constant 0 : i32
    %c0_i32_0 = arith.constant 0 : i32
    %c0_i32_1 = arith.constant 0 : i32
    return %c0_i32, %c0_i32_0 : i32, i32
  }
  func.func @transform_2(%arg0: i32) -> (i32, i32) {
    %c0_i32 = arith.constant 0 : i32
    %c0_i32_0 = arith.constant 0 : i32
    %c0_i32_1 = arith.constant 0 : i32
    return %c0_i32, %c0_i32_0 : i32, i32
  }
  func.func @transform_3(%arg0: i32) -> (i32, i32) {
    %c0_i32 = arith.constant 0 : i32
    %c0_i32_0 = arith.constant 0 : i32
    %c0_i32_1 = arith.constant 0 : i32
    return %c0_i32, %c0_i32_0 : i32, i32
  }
  func.func @transform_4(%arg0: i32) -> (i32, i32) {
    %c0_i32 = arith.constant 0 : i32
    %c0_i32_0 = arith.constant 0 : i32
    %c0_i32_1 = arith.constant 0 : i32
    return %c0_i32, %c0_i32_0 : i32, i32
  }
  func.func @transform_5(%arg0: i32) -> (i32, i32) {
    %c0_i32 = arith.constant 0 : i32
    %c0_i32_0 = arith.constant 0 : i32
    return %arg0, %c0_i32 : i32, i32
  }
  func.func @transform_6(%arg0: i32) -> (i32, i32, i32) {
    %c0_i32 = arith.constant 0 : i32
    %c0_i32_0 = arith.constant 0 : i32
    %c0_i32_1 = arith.constant 0 : i32
    return %arg0, %c0_i32, %c0_i32_0 : i32, i32, i32
  }
}

</mosaic_0001>

<llo_original>
// kernel: model_multi_modal.3
$region0: #{model_multi_modal.3}
  #allocation0 [shape = 'u32[]', space=smem, size = 0x4, offset = 0x4, fixed_abs, tag = 'smem constant byte address 0x4 - core index']
  #allocation1 [shape = 'u32[144,128]{1,0:T(1,128)}', space=vmem, size = 0x12000, scoped, tag = 'internal scratch']
  %s0 = inlined_call_operand.vmem [shape: f32[8,256], index: 0, kind: input, shape index: {}]
  %s1 = inlined_call_operand.vmem [shape: f32[1,256], index: 1, kind: input, shape index: {}]
  %s2 = inlined_call_operand.vmem [shape: f32[1,256], index: 2, kind: input, shape index: {}]
  %s3 = inlined_call_operand.vmem [shape: f32[8,128], index: 3, kind: output, shape index: {}]
  %s4 = sld [smem:[#allocation0]]
  $region22: #{model_multi_modal.3} parent=0
    _
  %s6 = ssub.s32 1, %s4
  %s7 = scalar_select 0, %s6, %s4
  // Predicated region
  $region2: #{model_multi_modal.3} parent=0 // pred_check
    _
  $region3: #{model_multi_modal.3} parent=0 // pred_check_branch
    %9 = sbr.rel (0) target = $region5
  $region4: #{model_multi_modal.3} parent=0 // pred_region
    _
  $region5: #{model_multi_modal.3} parent=0 // pred_fallthru
    _
  // Predicated region
  $region6: #{model_multi_modal.3} parent=0 // pred_check
    _
  $region7: #{model_multi_modal.3} parent=0 // pred_check_branch
    %11 = sbr.rel (0) target = $region9
  $region8: #{model_multi_modal.3} parent=0 // pred_region
    _
  $region9: #{model_multi_modal.3} parent=0 // pred_fallthru
    _
  // Predicated region
  $region10: #{model_multi_modal.3} parent=0 // pred_check
    _
  $region11: #{model_multi_modal.3} parent=0 // pred_check_branch
    %13 = sbr.rel (0) target = $region13
  $region12: #{model_multi_modal.3} parent=0 // pred_region
    _
  $region13: #{model_multi_modal.3} parent=0 // pred_fallthru
    _
  %v14 = vld [vmem:[%s0] sm:$0xff]
  %v15 = vld [vmem:[%s0 + $0x8] sm:$0xff]
  %v16 = vld [vmem:[%s1] sm:$0x3]
  %v18 = vlaneseq
  %v19 = vshrl.u32 %v18, 7
  %v20 = vsub.s32 0, %v19
  %v21 = vrot.slane %v16, %v20
  %v22 = vlaneseq
  %v23 = vshrl.u32 %v22, 7
  %v24 = vsub.s32 1, %v23
  %v25 = vrot.slane %v16, %v24
  %v28 = vsub.f32 %v14, %v21
  %v29 = vsub.f32 %v15, %v25
  %v30 = vld [vmem:[%s2] sm:$0x3]
  %v32 = vlaneseq
  %v33 = vshrl.u32 %v32, 7
  %v34 = vsub.s32 0, %v33
  %v35 = vrot.slane %v30, %v34
  %v36 = vlaneseq
  %v37 = vshrl.u32 %v36, 7
  %v38 = vsub.s32 1, %v37
  %v39 = vrot.slane %v30, %v38
  %v42 = vmul.f32 %v28, %v35
  %v43 = vmul.f32 %v29, %v39
  %45 = vrot.lane.b32.xlu0 %v42, 112
  %v46 = vpop.permute.xlu0 %45
  %v48 = vadd.f32 %v42, %v46
  %49 = vrot.lane.b32.xlu0 %v42, 96
  %v50 = vpop.permute.xlu0 %49
  %v52 = vadd.f32 %v48, %v50
  %53 = vrot.lane.b32.xlu0 %v42, 80
  %v54 = vpop.permute.xlu0 %53
  %v56 = vadd.f32 %v52, %v54
  %57 = vrot.lane.b32.xlu0 %v42, 64
  %v58 = vpop.permute.xlu0 %57
  %v60 = vadd.f32 %v56, %v58
  %vm61 = vcmask 130048
  %v62 = vsel %vm61, %v60, 0.0
  %63 = vadd.xlane.f32.xlu0 %v62
  %v64 = vpop.xlane.xlu0 %63
  %65 = vrot.lane.b32.xlu0 %v42, 48
  %v66 = vpop.permute.xlu0 %65
  %vm68 = vcmask 31744
  %v69 = vsel %vm68, %v66, 0.0
  %70 = vadd.xlane.f32.xlu0 %v69
  %v71 = vpop.xlane.xlu0 %70
  %v72 = vadd.f32 %v64, %v71
  %74 = vrot.lane.b32.xlu0 %v43, 96
  %v75 = vpop.permute.xlu0 %74
  %vm76 = vcmask 785408
  %v77 = vsel %vm76, %v50, %v75
  %v79 = vadd.f32 %v48, %v77
  %80 = vrot.lane.b32.xlu0 %v43, 80
  %v81 = vpop.permute.xlu0 %80
  %v83 = vadd.f32 %v79, %v81
  %84 = vrot.lane.b32.xlu0 %v43, 64
  %v85 = vpop.permute.xlu0 %84
  %v87 = vadd.f32 %v83, %v85
  %89 = vrot.lane.b32.xlu0 %v87, 44
  %v90 = vpop.permute.xlu0 %89
  %v92 = vsel %vm61, %v90, 0.0
  %93 = vadd.xlane.f32.xlu0 %v92
  %v94 = vpop.xlane.xlu0 %93
  %95 = vrot.lane.b32.xlu0 %v43, 92
  %v96 = vpop.permute.xlu0 %95
  %v98 = vsel %vm68, %v96, 0.0
  %99 = vadd.xlane.f32.xlu0 %v98
  %v100 = vpop.xlane.xlu0 %99
  %v101 = vadd.f32 %v94, %v100
  %102 = vst.msk [vmem:[%s3] sm:$0xff] %vm61, %v60
  %103 = vrot.lane.b32.xlu0 %v87, 60
  %v104 = vpop.permute.xlu0 %103
  %vm106 = vcmask 261248
  %107 = vst.msk [vmem:[%s3] sm:$0xff] %vm106, %v104
  %vm108 = vcmask 269568
  %109 = vst.msk [vmem:[%s3] sm:$0xff] %vm108, %v72
  %vm110 = vcmask 277768
  %111 = vst.msk [vmem:[%s3] sm:$0xff] %vm110, %v101
  %vm112 = vcmask 1047824
  %113 = vst.msk [vmem:[%s3] sm:$0xff] %vm112, 0.0
  // Predicated region
  $region14: #{model_multi_modal.3} parent=0 // pred_check
    _
  $region15: #{model_multi_modal.3} parent=0 // pred_check_branch
    %115 = sbr.rel (0) target = $region17
  $region16: #{model_multi_modal.3} parent=0 // pred_region
    _
  $region17: #{model_multi_modal.3} parent=0 // pred_fallthru
    _
  // Predicated region
  $region18: #{model_multi_modal.3} parent=0 // pred_check
    _
  $region19: #{model_multi_modal.3} parent=0 // pred_check_branch
    %117 = sbr.rel (0) target = $region21
  $region20: #{model_multi_modal.3} parent=0 // pred_region
    _
  $region21: #{model_multi_modal.3} parent=0 // pred_fallthru
    _

// kernel: model_multi_modal.2
$region0: #{model_multi_modal.2}
  #allocation0 [shape = 'u32[]', space=smem, size = 0x4, offset = 0x4, fixed_abs, tag = 'smem constant byte address 0x4 - core index']
  #allocation1 [shape = 'u32[144,128]{1,0:T(1,128)}', space=vmem, size = 0x12000, scoped, tag = 'internal scratch']
  %s0 = inlined_call_operand.vmem [shape: f32[8,128], index: 0, kind: input, shape index: {}]
  %s1 = inlined_call_operand.vmem [shape: f32[10,256], index: 1, kind: input, shape index: {}]
  %s2 = inlined_call_operand.vmem [shape: f32[10,256], index: 2, kind: input, shape index: {}]
  %s3 = inlined_call_operand.vmem [shape: f32[10,256], index: 3, kind: input, shape index: {}]
  %s4 = inlined_call_operand.vmem [shape: f32[1,256], index: 4, kind: input, shape index: {}]
  %s5 = inlined_call_operand.vmem [shape: f32[8,256], index: 5, kind: output, shape index: {0}]
  %s6 = inlined_call_operand.vmem [shape: f32[1,2,256], index: 6, kind: output, shape index: {1}]
  %7 = xla_tuple %s5, %s6
  %s8 = sld [smem:[#allocation0]]
  $region38: #{model_multi_modal.2} parent=0
    _
  %s10 = ssub.s32 1, %s8
  %s11 = scalar_select 0, %s10, %s8
  // Predicated region
  $region2: #{model_multi_modal.2} parent=0 // pred_check
    _
  $region3: #{model_multi_modal.2} parent=0 // pred_check_branch
    %13 = sbr.rel (0) target = $region5
  $region4: #{model_multi_modal.2} parent=0 // pred_region
    _
  $region5: #{model_multi_modal.2} parent=0 // pred_fallthru
    _
  // Predicated region
  $region6: #{model_multi_modal.2} parent=0 // pred_check
    _
  $region7: #{model_multi_modal.2} parent=0 // pred_check_branch
    %15 = sbr.rel (0) target = $region9
  $region8: #{model_multi_modal.2} parent=0 // pred_region
    _
  $region9: #{model_multi_modal.2} parent=0 // pred_fallthru
    _
  // Predicated region
  $region10: #{model_multi_modal.2} parent=0 // pred_check
    _
  $region11: #{model_multi_modal.2} parent=0 // pred_check_branch
    %17 = sbr.rel (0) target = $region13
  $region12: #{model_multi_modal.2} parent=0 // pred_region
    _
  $region13: #{model_multi_modal.2} parent=0 // pred_fallthru
    _
  // Predicated region
  $region14: #{model_multi_modal.2} parent=0 // pred_check
    _
  $region15: #{model_multi_modal.2} parent=0 // pred_check_branch
    %19 = sbr.rel (0) target = $region17
  $region16: #{model_multi_modal.2} parent=0 // pred_region
    _
  $region17: #{model_multi_modal.2} parent=0 // pred_fallthru
    _
  // Predicated region
  $region18: #{model_multi_modal.2} parent=0 // pred_check
    _
  $region19: #{model_multi_modal.2} parent=0 // pred_check_branch
    %21 = sbr.rel (0) target = $region21
  $region20: #{model_multi_modal.2} parent=0 // pred_region
    _
  $region21: #{model_multi_modal.2} parent=0 // pred_fallthru
    _
  %v22 = vld [vmem:[%s0] sm:$0xff]
  %vm23 = vcmask 130048
  %24 = vst.msk [vmem:[%s5] sm:$0xff] %vm23, %v22
  %26 = vset.pattern.permute.xlu0 32
  %27 = vperm.xlu0 %26, %v22
  %v28 = vpop.permute.xlu0 %27
  %v30 = vmul.f32 %v22, %v28
  %32 = vrot.lane.b32.xlu0 %v30, 16
  %v33 = vpop.permute.xlu0 %32
  %vm35 = vcmask 261248
  %36 = vst.msk [vmem:[%s5] sm:$0xff] %vm35, %v33
  %37 = vset.pattern.permute.xlu0 33
  %38 = vperm.xlu0 %37, %v22
  %v39 = vpop.permute.xlu0 %38
  %v41 = vmul.f32 %v22, %v39
  %43 = vrot.lane.b32.xlu0 %v41, 32
  %v44 = vpop.permute.xlu0 %43
  %vm46 = vcmask 392448
  %47 = vst.msk [vmem:[%s5] sm:$0xff] %vm46, %v44
  %48 = vset.pattern.permute.xlu0 34
  %49 = vperm.xlu0 %48, %v22
  %v50 = vpop.permute.xlu0 %49
  %v52 = vmul.f32 %v22, %v50
  %54 = vrot.lane.b32.xlu0 %v52, 48
  %v55 = vpop.permute.xlu0 %54
  %vm57 = vcmask 523648
  %58 = vst.msk [vmem:[%s5] sm:$0xff] %vm57, %v55
  %59 = vset.pattern.permute.xlu0 35
  %60 = vperm.xlu0 %59, %v22
  %v61 = vpop.permute.xlu0 %60
  %v63 = vmul.f32 %v22, %v61
  %65 = vrot.lane.b32.xlu0 %v63, 64
  %v66 = vpop.permute.xlu0 %65
  %vm68 = vcmask 654848
  %69 = vst.msk [vmem:[%s5] sm:$0xff] %vm68, %v66
  %70 = vrot.lane.b32.xlu0 %v22, 48
  %v71 = vpop.permute.xlu0 %70
  %vm73 = vcmask 687744
  %74 = vst.msk [vmem:[%s5] sm:$0xff] %vm73, %v71
  %75 = vrot.lane.b32.xlu0 %v22, 68
  %v76 = vpop.permute.xlu0 %75
  %vm78 = vcmask 818848
  %79 = vst.msk [vmem:[%s5] sm:$0xff] %vm78, %v76
  %80 = vrot.lane.b32.xlu0 %v30, 84
  %v81 = vpop.permute.xlu0 %80
  %vm83 = vcmask 950048
  %84 = vst.msk [vmem:[%s5] sm:$0xff] %vm83, %v81
  %85 = vrot.lane.b32.xlu0 %v41, 100
  %v86 = vpop.permute.xlu0 %85
  %vm88 = vcmask 1048480
  %89 = vst.msk [vmem:[%s5] sm:$0xff] %vm88, %v86
  %vm90 = vcmask 31744
  %91 = vst.msk [vmem:[%s5 + $0x8] sm:$0xff] %vm90, %v86
  %92 = vrot.lane.b32.xlu0 %v52, 116
  %v93 = vpop.permute.xlu0 %92
  %vm95 = vcmask 162848
  %96 = vst.msk [vmem:[%s5 + $0x8] sm:$0xff] %vm95, %v93
  %97 = vrot.lane.b32.xlu0 %v63, 4
  %v98 = vpop.permute.xlu0 %97
  %vm100 = vcmask 294048
  %101 = vst.msk [vmem:[%s5 + $0x8] sm:$0xff] %vm100, %v98
  %102 = vrot.lane.b32.xlu0 %v22, 4
  %v103 = vpop.permute.xlu0 %102
  %vm105 = vcmask 326944
  %106 = vst.msk [vmem:[%s5 + $0x8] sm:$0xff] %vm105, %v103
  %vm107 = vcmask 1047872
  %108 = vst.msk [vmem:[%s5 + $0x8] sm:$0xff] %vm107, 0.0
  %v109 = vld [vmem:[%s5] sm:$0xff]
  %v110 = vld [vmem:[%s5 + $0x8] sm:$0xff]
  %v111 = vld [vmem:[%s4] sm:$0x3]
  %v112 = vld [vmem:[%s1] ss:$8 sm:$0x3]
  %v114 = vlaneseq
  %v115 = vshrl.u32 %v114, 7
  %v116 = vsub.s32 0, %v115
  %v117 = vrot.slane %v112, %v116
  %v118 = vlaneseq
  %v119 = vshrl.u32 %v118, 7
  %v120 = vsub.s32 1, %v119
  %v121 = vrot.slane %v112, %v120
  %v124 = vmul.f32 %v117, %v109
  %v125 = vmul.f32 %v121, %v110
  %v126 = vld [vmem:[%s2] ss:$8 sm:$0x3]
  %v128 = vlaneseq
  %v129 = vshrl.u32 %v128, 7
  %v130 = vsub.s32 0, %v129
  %v131 = vrot.slane %v126, %v130
  %v132 = vlaneseq
  %v133 = vshrl.u32 %v132, 7
  %v134 = vsub.s32 1, %v133
  %v135 = vrot.slane %v126, %v134
  %v138 = vadd.f32 %v124, %v131
  %v139 = vadd.f32 %v125, %v135
  %v140 = vmax.f32 %v138, 0.0
  %v141 = vmax.f32 %v139, 0.0
  %v142 = vld [vmem:[%s3] ss:$8 sm:$0x3]
  %v144 = vlaneseq
  %v145 = vshrl.u32 %v144, 7
  %v146 = vsub.s32 0, %v145
  %v147 = vrot.slane %v142, %v146
  %v148 = vlaneseq
  %v149 = vshrl.u32 %v148, 7
  %v150 = vsub.s32 1, %v149
  %v151 = vrot.slane %v142, %v150
  %v154 = vmul.f32 %v147, %v140
  %v155 = vmul.f32 %v151, %v141
  %v157 = vlaneseq
  %v158 = vshrl.u32 %v157, 7
  %v159 = vsub.s32 0, %v158
  %v160 = vrot.slane %v111, %v159
  %v161 = vlaneseq
  %v162 = vshrl.u32 %v161, 7
  %v163 = vsub.s32 1, %v162
  %v164 = vrot.slane %v111, %v163
  %v167 = vadd.f32 %v160, %v154
  %v168 = vadd.f32 %v164, %v155
  %s169 = scalar_lea.vmem %s1, 1
  %v170 = vld [vmem:[%s169] ss:$8 sm:$0x3]
  %v172 = vlaneseq
  %v173 = vshrl.u32 %v172, 7
  %v174 = vsub.s32 0, %v173
  %v175 = vrot.slane %v170, %v174
  %v176 = vlaneseq
  %v177 = vshrl.u32 %v176, 7
  %v178 = vsub.s32 1, %v177
  %v179 = vrot.slane %v170, %v178
  %v182 = vmul.f32 %v175, %v109
  %v183 = vmul.f32 %v179, %v110
  %s184 = scalar_lea.vmem %s2, 1
  %v185 = vld [vmem:[%s184] ss:$8 sm:$0x3]
  %v187 = vlaneseq
  %v188 = vshrl.u32 %v187, 7
  %v189 = vsub.s32 0, %v188
  %v190 = vrot.slane %v185, %v189
  %v191 = vlaneseq
  %v192 = vshrl.u32 %v191, 7
  %v193 = vsub.s32 1, %v192
  %v194 = vrot.slane %v185, %v193
  %v197 = vadd.f32 %v182, %v190
  %v198 = vadd.f32 %v183, %v194
  %v199 = vmax.f32 %v197, 0.0
  %v200 = vmax.f32 %v198, 0.0
  %s201 = scalar_lea.vmem %s3, 1
  %v202 = vld [vmem:[%s201] ss:$8 sm:$0x3]
  %v204 = vlaneseq
  %v205 = vshrl.u32 %v204, 7
  %v206 = vsub.s32 0, %v205
  %v207 = vrot.slane %v202, %v206
  %v208 = vlaneseq
  %v209 = vshrl.u32 %v208, 7
  %v210 = vsub.s32 1, %v209
  %v211 = vrot.slane %v202, %v210
  %v214 = vmul.f32 %v207, %v199
  %v215 = vmul.f32 %v211, %v200
  %v216 = vadd.f32 %v167, %v214
  %v217 = vadd.f32 %v168, %v215
  %s218 = scalar_lea.vmem %s1, 2
  %v219 = vld [vmem:[%s218] ss:$8 sm:$0x3]
  %v221 = vlaneseq
  %v222 = vshrl.u32 %v221, 7
  %v223 = vsub.s32 0, %v222
  %v224 = vrot.slane %v219, %v223
  %v225 = vlaneseq
  %v226 = vshrl.u32 %v225, 7
  %v227 = vsub.s32 1, %v226
  %v228 = vrot.slane %v219, %v227
  %v231 = vmul.f32 %v224, %v109
  %v232 = vmul.f32 %v228, %v110
  %s233 = scalar_lea.vmem %s2, 2
  %v234 = vld [vmem:[%s233] ss:$8 sm:$0x3]
  %v236 = vlaneseq
  %v237 = vshrl.u32 %v236, 7
  %v238 = vsub.s32 0, %v237
  %v239 = vrot.slane %v234, %v238
  %v240 = vlaneseq
  %v241 = vshrl.u32 %v240, 7
  %v242 = vsub.s32 1, %v241
  %v243 = vrot.slane %v234, %v242
  %v246 = vadd.f32 %v231, %v239
  %v247 = vadd.f32 %v232, %v243
  %v248 = vmax.f32 %v246, 0.0
  %v249 = vmax.f32 %v247, 0.0
  %s250 = scalar_lea.vmem %s3, 2
  %v251 = vld [vmem:[%s250] ss:$8 sm:$0x3]
  %v253 = vlaneseq
  %v254 = vshrl.u32 %v253, 7
  %v255 = vsub.s32 0, %v254
  %v256 = vrot.slane %v251, %v255
  %v257 = vlaneseq
  %v258 = vshrl.u32 %v257, 7
  %v259 = vsub.s32 1, %v258
  %v260 = vrot.slane %v251, %v259
  %v263 = vmul.f32 %v256, %v248
  %v264 = vmul.f32 %v260, %v249
  %v265 = vadd.f32 %v216, %v263
  %v266 = vadd.f32 %v217, %v264
  %s267 = scalar_lea.vmem %s1, 3
  %v268 = vld [vmem:[%s267] ss:$8 sm:$0x3]
  %v270 = vlaneseq
  %v271 = vshrl.u32 %v270, 7
  %v272 = vsub.s32 0, %v271
  %v273 = vrot.slane %v268, %v272
  %v274 = vlaneseq
  %v275 = vshrl.u32 %v274, 7
  %v276 = vsub.s32 1, %v275
  %v277 = vrot.slane %v268, %v276
  %v280 = vmul.f32 %v273, %v109
  %v281 = vmul.f32 %v277, %v110
  %s282 = scalar_lea.vmem %s2, 3
  %v283 = vld [vmem:[%s282] ss:$8 sm:$0x3]
  %v285 = vlaneseq
  %v286 = vshrl.u32 %v285, 7
  %v287 = vsub.s32 0, %v286
  %v288 = vrot.slane %v283, %v287
  %v289 = vlaneseq
  %v290 = vshrl.u32 %v289, 7
  %v291 = vsub.s32 1, %v290
  %v292 = vrot.slane %v283, %v291
  %v295 = vadd.f32 %v280, %v288
  %v296 = vadd.f32 %v281, %v292
  %v297 = vmax.f32 %v295, 0.0
  %v298 = vmax.f32 %v296, 0.0
  %s299 = scalar_lea.vmem %s3, 3
  %v300 = vld [vmem:[%s299] ss:$8 sm:$0x3]
  %v302 = vlaneseq
  %v303 = vshrl.u32 %v302, 7
  %v304 = vsub.s32 0, %v303
  %v305 = vrot.slane %v300, %v304
  %v306 = vlaneseq
  %v307 = vshrl.u32 %v306, 7
  %v308 = vsub.s32 1, %v307
  %v309 = vrot.slane %v300, %v308
  %v312 = vmul.f32 %v305, %v297
  %v313 = vmul.f32 %v309, %v298
  %v314 = vadd.f32 %v265, %v312
  %v315 = vadd.f32 %v266, %v313
  %s316 = scalar_lea.vmem %s1, 4
  %v317 = vld [vmem:[%s316] ss:$8 sm:$0x3]
  %v319 = vlaneseq
  %v320 = vshrl.u32 %v319, 7
  %v321 = vsub.s32 0, %v320
  %v322 = vrot.slane %v317, %v321
  %v323 = vlaneseq
  %v324 = vshrl.u32 %v323, 7
  %v325 = vsub.s32 1, %v324
  %v326 = vrot.slane %v317, %v325
  %v329 = vmul.f32 %v322, %v109
  %v330 = vmul.f32 %v326, %v110
  %s331 = scalar_lea.vmem %s2, 4
  %v332 = vld [vmem:[%s331] ss:$8 sm:$0x3]
  %v334 = vlaneseq
  %v335 = vshrl.u32 %v334, 7
  %v336 = vsub.s32 0, %v335
  %v337 = vrot.slane %v332, %v336
  %v338 = vlaneseq
  %v339 = vshrl.u32 %v338, 7
  %v340 = vsub.s32 1, %v339
  %v341 = vrot.slane %v332, %v340
  %v344 = vadd.f32 %v329, %v337
  %v345 = vadd.f32 %v330, %v341
  %v346 = vmax.f32 %v344, 0.0
  %v347 = vmax.f32 %v345, 0.0
  %s348 = scalar_lea.vmem %s3, 4
  %v349 = vld [vmem:[%s348] ss:$8 sm:$0x3]
  %v351 = vlaneseq
  %v352 = vshrl.u32 %v351, 7
  %v353 = vsub.s32 0, %v352
  %v354 = vrot.slane %v349, %v353
  %v355 = vlaneseq
  %v356 = vshrl.u32 %v355, 7
  %v357 = vsub.s32 1, %v356
  %v358 = vrot.slane %v349, %v357
  %v361 = vmul.f32 %v354, %v346
  %v362 = vmul.f32 %v358, %v347
  %v363 = vadd.f32 %v314, %v361
  %v364 = vadd.f32 %v315, %v362
  %s365 = scalar_lea.vmem %s1, 5
  %v366 = vld [vmem:[%s365] ss:$8 sm:$0x3]
  %v368 = vlaneseq
  %v369 = vshrl.u32 %v368, 7
  %v370 = vsub.s32 0, %v369
  %v371 = vrot.slane %v366, %v370
  %v372 = vlaneseq
  %v373 = vshrl.u32 %v372, 7
  %v374 = vsub.s32 1, %v373
  %v375 = vrot.slane %v366, %v374
  %v378 = vmul.f32 %v371, %v109
  %v379 = vmul.f32 %v375, %v110
  %s380 = scalar_lea.vmem %s2, 5
  %v381 = vld [vmem:[%s380] ss:$8 sm:$0x3]
  %v383 = vlaneseq
  %v384 = vshrl.u32 %v383, 7
  %v385 = vsub.s32 0, %v384
  %v386 = vrot.slane %v381, %v385
  %v387 = vlaneseq
  %v388 = vshrl.u32 %v387, 7
  %v389 = vsub.s32 1, %v388
  %v390 = vrot.slane %v381, %v389
  %v393 = vadd.f32 %v378, %v386
  %v394 = vadd.f32 %v379, %v390
  %v395 = vmax.f32 %v393, 0.0
  %v396 = vmax.f32 %v394, 0.0
  %s397 = scalar_lea.vmem %s3, 5
  %v398 = vld [vmem:[%s397] ss:$8 sm:$0x3]
  %v400 = vlaneseq
  %v401 = vshrl.u32 %v400, 7
  %v402 = vsub.s32 0, %v401
  %v403 = vrot.slane %v398, %v402
  %v404 = vlaneseq
  %v405 = vshrl.u32 %v404, 7
  %v406 = vsub.s32 1, %v405
  %v407 = vrot.slane %v398, %v406
  %v410 = vmul.f32 %v403, %v395
  %v411 = vmul.f32 %v407, %v396
  %v412 = vadd.f32 %v363, %v410
  %v413 = vadd.f32 %v364, %v411
  %s414 = scalar_lea.vmem %s1, 6
  %v415 = vld [vmem:[%s414] ss:$8 sm:$0x3]
  %v417 = vlaneseq
  %v418 = vshrl.u32 %v417, 7
  %v419 = vsub.s32 0, %v418
  %v420 = vrot.slane %v415, %v419
  %v421 = vlaneseq
  %v422 = vshrl.u32 %v421, 7
  %v423 = vsub.s32 1, %v422
  %v424 = vrot.slane %v415, %v423
  %v427 = vmul.f32 %v420, %v109
  %v428 = vmul.f32 %v424, %v110
  %s429 = scalar_lea.vmem %s2, 6
  %v430 = vld [vmem:[%s429] ss:$8 sm:$0x3]
  %v432 = vlaneseq
  %v433 = vshrl.u32 %v432, 7
  %v434 = vsub.s32 0, %v433
  %v435 = vrot.slane %v430, %v434
  %v436 = vlaneseq
  %v437 = vshrl.u32 %v436, 7
  %v438 = vsub.s32 1, %v437
  %v439 = vrot.slane %v430, %v438
  %v442 = vadd.f32 %v427, %v435
  %v443 = vadd.f32 %v428, %v439
  %v444 = vmax.f32 %v442, 0.0
  %v445 = vmax.f32 %v443, 0.0
  %s446 = scalar_lea.vmem %s3, 6
  %v447 = vld [vmem:[%s446] ss:$8 sm:$0x3]
  %v449 = vlaneseq
  %v450 = vshrl.u32 %v449, 7
  %v451 = vsub.s32 0, %v450
  %v452 = vrot.slane %v447, %v451
  %v453 = vlaneseq
  %v454 = vshrl.u32 %v453, 7
  %v455 = vsub.s32 1, %v454
  %v456 = vrot.slane %v447, %v455
  %v459 = vmul.f32 %v452, %v444
  %v460 = vmul.f32 %v456, %v445
  %v461 = vadd.f32 %v412, %v459
  %v462 = vadd.f32 %v413, %v460
  %s463 = scalar_lea.vmem %s1, 7
  %v464 = vld [vmem:[%s463] ss:$8 sm:$0x3]
  %v466 = vlaneseq
  %v467 = vshrl.u32 %v466, 7
  %v468 = vsub.s32 0, %v467
  %v469 = vrot.slane %v464, %v468
  %v470 = vlaneseq
  %v471 = vshrl.u32 %v470, 7
  %v472 = vsub.s32 1, %v471
  %v473 = vrot.slane %v464, %v472
  %v476 = vmul.f32 %v469, %v109
  %v477 = vmul.f32 %v473, %v110
  %s478 = scalar_lea.vmem %s2, 7
  %v479 = vld [vmem:[%s478] ss:$8 sm:$0x3]
  %v481 = vlaneseq
  %v482 = vshrl.u32 %v481, 7
  %v483 = vsub.s32 0, %v482
  %v484 = vrot.slane %v479, %v483
  %v485 = vlaneseq
  %v486 = vshrl.u32 %v485, 7
  %v487 = vsub.s32 1, %v486
  %v488 = vrot.slane %v479, %v487
  %v491 = vadd.f32 %v476, %v484
  %v492 = vadd.f32 %v477, %v488
  %v493 = vmax.f32 %v491, 0.0
  %v494 = vmax.f32 %v492, 0.0
  %s495 = scalar_lea.vmem %s3, 7
  %v496 = vld [vmem:[%s495] ss:$8 sm:$0x3]
  %v498 = vlaneseq
  %v499 = vshrl.u32 %v498, 7
  %v500 = vsub.s32 0, %v499
  %v501 = vrot.slane %v496, %v500
  %v502 = vlaneseq
  %v503 = vshrl.u32 %v502, 7
  %v504 = vsub.s32 1, %v503
  %v505 = vrot.slane %v496, %v504
  %v508 = vmul.f32 %v501, %v493
  %v509 = vmul.f32 %v505, %v494
  %v510 = vadd.f32 %v461, %v508
  %v511 = vadd.f32 %v462, %v509
  %s512 = scalar_lea.vmem %s1, 16
  %v513 = vld [vmem:[%s512] ss:$8 sm:$0x3]
  %v515 = vlaneseq
  %v516 = vshrl.u32 %v515, 7
  %v517 = vsub.s32 0, %v516
  %v518 = vrot.slane %v513, %v517
  %v519 = vlaneseq
  %v520 = vshrl.u32 %v519, 7
  %v521 = vsub.s32 1, %v520
  %v522 = vrot.slane %v513, %v521
  %v525 = vmul.f32 %v518, %v109
  %v526 = vmul.f32 %v522, %v110
  %s527 = scalar_lea.vmem %s2, 16
  %v528 = vld [vmem:[%s527] ss:$8 sm:$0x3]
  %v530 = vlaneseq
  %v531 = vshrl.u32 %v530, 7
  %v532 = vsub.s32 0, %v531
  %v533 = vrot.slane %v528, %v532
  %v534 = vlaneseq
  %v535 = vshrl.u32 %v534, 7
  %v536 = vsub.s32 1, %v535
  %v537 = vrot.slane %v528, %v536
  %v540 = vadd.f32 %v525, %v533
  %v541 = vadd.f32 %v526, %v537
  %v542 = vmax.f32 %v540, 0.0
  %v543 = vmax.f32 %v541, 0.0
  %s544 = scalar_lea.vmem %s3, 16
  %v545 = vld [vmem:[%s544] ss:$8 sm:$0x3]
  %v547 = vlaneseq
  %v548 = vshrl.u32 %v547, 7
  %v549 = vsub.s32 0, %v548
  %v550 = vrot.slane %v545, %v549
  %v551 = vlaneseq
  %v552 = vshrl.u32 %v551, 7
  %v553 = vsub.s32 1, %v552
  %v554 = vrot.slane %v545, %v553
  %v557 = vmul.f32 %v550, %v542
  %v558 = vmul.f32 %v554, %v543
  %v559 = vadd.f32 %v510, %v557
  %v560 = vadd.f32 %v511, %v558
  %s561 = scalar_lea.vmem %s1, 17
  %v562 = vld [vmem:[%s561] ss:$8 sm:$0x3]
  %v564 = vlaneseq
  %v565 = vshrl.u32 %v564, 7
  %v566 = vsub.s32 0, %v565
  %v567 = vrot.slane %v562, %v566
  %v568 = vlaneseq
  %v569 = vshrl.u32 %v568, 7
  %v570 = vsub.s32 1, %v569
  %v571 = vrot.slane %v562, %v570
  %v574 = vmul.f32 %v567, %v109
  %v575 = vmul.f32 %v571, %v110
  %s576 = scalar_lea.vmem %s2, 17
  %v577 = vld [vmem:[%s576] ss:$8 sm:$0x3]
  %v579 = vlaneseq
  %v580 = vshrl.u32 %v579, 7
  %v581 = vsub.s32 0, %v580
  %v582 = vrot.slane %v577, %v581
  %v583 = vlaneseq
  %v584 = vshrl.u32 %v583, 7
  %v585 = vsub.s32 1, %v584
  %v586 = vrot.slane %v577, %v585
  %v589 = vadd.f32 %v574, %v582
  %v590 = vadd.f32 %v575, %v586
  %v591 = vmax.f32 %v589, 0.0
  %v592 = vmax.f32 %v590, 0.0
  %s593 = scalar_lea.vmem %s3, 17
  %v594 = vld [vmem:[%s593] ss:$8 sm:$0x3]
  %v596 = vlaneseq
  %v597 = vshrl.u32 %v596, 7
  %v598 = vsub.s32 0, %v597
  %v599 = vrot.slane %v594, %v598
  %v600 = vlaneseq
  %v601 = vshrl.u32 %v600, 7
  %v602 = vsub.s32 1, %v601
  %v603 = vrot.slane %v594, %v602
  %v606 = vmul.f32 %v599, %v591
  %v607 = vmul.f32 %v603, %v592
  %v608 = vadd.f32 %v559, %v606
  %v609 = vadd.f32 %v560, %v607
  %v610 = vadd.f32 %v109, %v608
  %v611 = vadd.f32 %v110, %v609
  %612 = vst [vmem:[%s5] sm:$0xff] %v610
  %613 = vst [vmem:[%s5 + $0x8] sm:$0xff] %v611
  %s614 = smul.u32 0, 8
  %v615 = vlaneseq
  %v616 = vshrl.u32 %v615, 7
  %v617 = vstv %s614
  %v618 = vadd.s32 %v617, %v616
  %vm619 = vcmp.lt.s32.totalorder %v618, 8
  %v620 = vsel %vm619, 1, 0
  %v621 = vcvt.s32.f32 %v620
  %v622 = vmul.f32 %v610, %v621
  %v623 = vmul.f32 %v611, %v621
  %v624 = vrot.slane %v622, 4
  %v625 = vadd.f32 %v622, %v624
  %v626 = vrot.slane %v625, 2
  %v627 = vadd.f32 %v625, %v626
  %v628 = vrot.slane %v627, 1
  %v629 = vadd.f32 %v627, %v628
  %v630 = vrot.slane %v623, 4
  %v631 = vadd.f32 %v623, %v630
  %v632 = vrot.slane %v631, 2
  %v633 = vadd.f32 %v631, %v632
  %v634 = vrot.slane %v633, 1
  %v635 = vadd.f32 %v633, %v634
  %v638 = vcombine.low %v629, %v635
  %v640 = vunpack.c.l.s4 1966171168
  %v641 = vunpack.c.0.s8 %v640
  %v642 = vlaneseq
  %v643 = vshrl.u32 %v642, 7
  %v644 = vsub.s32 %v641, %v643
  %v645 = vrot.slane %v638, %v644
  %v647 = vunpack.c.l.s4 1966171168
  %v648 = vunpack.c.0.s8 %v647
  %v649 = vlaneseq
  %v650 = vshrl.u32 %v649, 7
  %v651 = vsub.s32 %v648, %v650
  %v652 = vrot.slane %v645, %v651
  %v654 = vlaneseq
  %vm655 = vcmp.ge.s32.totalorder %v654, 0
  %vm656 = vcmp.lt.s32.totalorder %v654, 256
  %vm657 = vmand %vm655, %vm656
  %658 = vst.msk [vmem:[%s6] ss:$2 sm:$0x3] %vm657, %v652
  %v659 = vmul.f32 %v622, %v610
  %v660 = vmul.f32 %v623, %v611
  %v661 = vrot.slane %v659, 4
  %v662 = vadd.f32 %v659, %v661
  %v663 = vrot.slane %v662, 2
  %v664 = vadd.f32 %v662, %v663
  %v665 = vrot.slane %v664, 1
  %v666 = vadd.f32 %v664, %v665
  %v667 = vrot.slane %v660, 4
  %v668 = vadd.f32 %v660, %v667
  %v669 = vrot.slane %v668, 2
  %v670 = vadd.f32 %v668, %v669
  %v671 = vrot.slane %v670, 1
  %v672 = vadd.f32 %v670, %v671
  %v675 = vcombine.low %v666, %v672
  %v677 = vunpack.c.l.s4 1966171168
  %v678 = vunpack.c.0.s8 %v677
  %v679 = vlaneseq
  %v680 = vshrl.u32 %v679, 7
  %v681 = vsub.s32 %v678, %v680
  %v682 = vrot.slane %v675, %v681
  %v684 = vunpack.c.l.s4 1966171168
  %v685 = vunpack.c.0.s8 %v684
  %v686 = vlaneseq
  %v687 = vshrl.u32 %v686, 7
  %v688 = vsub.s32 %v685, %v687
  %v689 = vrot.slane %v682, %v688
  %s691 = scalar_lea.vmem %s6, 1
  %692 = vst.msk [vmem:[%s691] ss:$2 sm:$0x3] %vm657, %v689
  // Predicated region
  $region22: #{model_multi_modal.2} parent=0 // pred_check
    _
  $region23: #{model_multi_modal.2} parent=0 // pred_check_branch
    %694 = sbr.rel (0) target = $region25
  $region24: #{model_multi_modal.2} parent=0 // pred_region
    _
  $region25: #{model_multi_modal.2} parent=0 // pred_fallthru
    _
  // Predicated region
  $region26: #{model_multi_modal.2} parent=0 // pred_check
    _
  $region27: #{model_multi_modal.2} parent=0 // pred_check_branch
    %696 = sbr.rel (0) target = $region29
  $region28: #{model_multi_modal.2} parent=0 // pred_region
    _
  $region29: #{model_multi_modal.2} parent=0 // pred_fallthru
    _
  // Predicated region
  $region30: #{model_multi_modal.2} parent=0 // pred_check
    _
  $region31: #{model_multi_modal.2} parent=0 // pred_check_branch
    %698 = sbr.rel (0) target = $region33
  $region32: #{model_multi_modal.2} parent=0 // pred_region
    _
  $region33: #{model_multi_modal.2} parent=0 // pred_fallthru
    _
  // Predicated region
  $region34: #{model_multi_modal.2} parent=0 // pred_check
    _
  $region35: #{model_multi_modal.2} parent=0 // pred_check_branch
    %700 = sbr.rel (0) target = $region37
  $region36: #{model_multi_modal.2} parent=0 // pred_region
    _
  $region37: #{model_multi_modal.2} parent=0 // pred_fallthru
    _

</llo_original>
